<compile_context>
chip_gen: v5e
topology: v5e:2x2
jax: 0.10.0
libtpu: 0.0.40
codegen_flags: <defaults>
</compile_context>

<pallas_src>
import math

import jax
import jax.numpy as jnp
from jax import lax
from jax.experimental import pallas as pl
from jax.experimental.pallas import tpu as pltpu


# --------------------------------------------------------------------------- #
# Kernels
# --------------------------------------------------------------------------- #
def _resident_kernel(t_ref, freqs_ref, w1_ref, b1_ref, w2_ref, b2_ref, o_ref):
    """Single-step path: all operands resident in VMEM, no grid."""
    args = t_ref[...] * freqs_ref[...]                       # (N, half) f32
    emb = jnp.concatenate([jnp.cos(args), jnp.sin(args)], axis=-1)  # (N, 2*half)
    # First linear layer in f32 (embedding precision matters; W1 is tiny).
    h = jnp.dot(emb, w1_ref[...].astype(jnp.float32),
                preferred_element_type=jnp.float32) + b1_ref[...]
    h = h * jax.nn.sigmoid(h)                                # SiLU, f32
    # Second (large) linear layer: bf16 operands, f32 accumulation.
    out = jnp.dot(h.astype(w2_ref.dtype), w2_ref[...],
                  preferred_element_type=jnp.float32) + b2_ref[...]
    o_ref[...] = out.astype(o_ref.dtype)


def _streaming_kernel(t_ref, freqs_ref, w1_ref, b1_ref, w2t_ref, b2_ref,
                      o_ref, h_scratch):
    """Fallback path: stream contiguous row blocks of the transposed W2."""
    j = pl.program_id(0)

    # Compute the hidden activation once; it persists in f32 VMEM scratch
    # across the (sequential) output-column grid.
    @pl.when(j == 0)
    def _():
        args = t_ref[...] * freqs_ref[...]
        emb = jnp.concatenate([jnp.cos(args), jnp.sin(args)], axis=-1)
        h = jnp.dot(emb, w1_ref[...].astype(jnp.float32),
                    preferred_element_type=jnp.float32) + b1_ref[...]
        h_scratch[...] = h * jax.nn.sigmoid(h)               # f32 scratch

    # w2t block is (tn, n_ch_in): contract h axis 1 against block axis 1.
    out = lax.dot_general(
        h_scratch[...].astype(w2t_ref.dtype), w2t_ref[...],
        dimension_numbers=(((1,), (1,)), ((), ())),
        preferred_element_type=jnp.float32) + b2_ref[...]
    o_ref[...] = out.astype(o_ref.dtype)


# --------------------------------------------------------------------------- #
# Wrapper / one-time parameter preparation
# --------------------------------------------------------------------------- #
def _vmem_cap_bytes():
    """Per-core VMEM budget we allow a kernel to request (physical - headroom)."""
    phys = 128 << 20
    try:
        info = pltpu.get_tpu_info()
        phys = int(getattr(info, "vmem_capacity_bytes", phys))
    except Exception:
        pass
    # ~25% headroom for compiler-internal scratch: ~48 MiB on v7x (64 MiB
    # physical), ~96 MiB on v5e/v6e (128 MiB physical).
    return int(min(phys * 3 // 4, 100 << 20))


def prepare_params(params, frequency_embedding_size=256, max_period=10000.0,
                   force_streaming=False, max_batch_hint=1024):
    """One-time prep: bf16 weight casts, W2 layout choice, freqs table.

    Hoisted out of the per-step forward so the f32->bf16 converts and the
    transpose do not re-read the full weights from HBM on every call.
    """
    w1, b1, w2, b2 = params
    dim = frequency_embedding_size
    half = dim // 2
    n_ch = w1.shape[1]

    # Odd `dim`: PyTorch appends a zero column to the embedding; that column
    # only multiplies W1's last row, so dropping the row is exact.
    w1 = w1[: 2 * half, :]

    freqs = jnp.exp(
        -math.log(max_period) * jnp.arange(half, dtype=jnp.float32) / half
    ).reshape(1, half)

    w1_bf = w1.astype(jnp.bfloat16)
    b1_f = jnp.asarray(b1, jnp.float32).reshape(1, n_ch)
    b2_f = jnp.asarray(b2, jnp.float32).reshape(1, n_ch)

    cap = _vmem_cap_bytes()
    resident_est = (
        2 * half * n_ch * 2                                 # W1 bf16
        + n_ch * n_ch * 2                                   # W2 bf16
        + 2 * n_ch * 4                                      # biases
        + max_batch_hint * (1 + 2 * half + 2 * n_ch) * 4    # t, emb, h, out rows
        + (4 << 20))                                        # slack
    resident = (not force_streaming) and resident_est <= cap

    if resident:
        w2_arg = w2.astype(jnp.bfloat16)        # (in, out): one whole-array DMA
    else:
        w2_arg = w2.T.astype(jnp.bfloat16)      # (out, in): contiguous row blocks

    return dict(freqs=freqs, w1=w1_bf, b1=b1_f, w2=w2_arg, b2=b2_f,
                n_ch=n_ch, half=half, resident=resident, vmem_cap=cap)


def _pick_col_tile(n_ch, half, n, cap, max_col_tile=None):
    """Largest lane-dense W2T row tile that divides n_ch and fits the budget."""
    fixed = 2 * (2 * half * n_ch * 2) + n * n_ch * 4 + 2 * n_ch * 4 + (4 << 20)
    for c in (1024, 512, 384, 256, 128):
        if max_col_tile is not None and c > max_col_tile:
            continue
        if n_ch % c:
            continue
        if fixed + 3 * c * n_ch * 2 + 2 * n * c * 4 <= cap:
            return c
    return 128 if n_ch % 128 == 0 else n_ch


def _w2_block_spec(tn, n_ch_in):
    """W2T row-block spec, 3-deep buffered so two DMAs stay in flight."""
    index_map = lambda j: (j, 0)
    buffered = getattr(pl, "Buffered", None)
    if buffered is not None:
        try:
            return pl.BlockSpec((tn, n_ch_in), index_map,
                                pipeline_mode=buffered(3))
        except TypeError:
            pass  # pipeline_mode unsupported in this JAX build; default depth.
    return pl.BlockSpec((tn, n_ch_in), index_map)


def timestep_embedder(t, prepared, out_dtype=jnp.float32, max_col_tile=None):
    """t: (N,) -> (N, n_ch). `prepared` comes from prepare_params()."""
    n = t.shape[0]
    n_ch, half = prepared["n_ch"], prepared["half"]
    t2d = t.astype(jnp.float32).reshape(n, 1)
    args = (t2d, prepared["freqs"], prepared["w1"], prepared["b1"],
            prepared["w2"], prepared["b2"])

    if prepared["resident"]:
        est = (2 * half * n_ch * 2 + n_ch * n_ch * 2 + 2 * n_ch * 4
               + n * (1 + 2 * half + 2 * n_ch) * 4 + (2 << 20))
        vmem_limit = int(min(max(est, 16 << 20), prepared["vmem_cap"]))
        vmem_spec = pl.BlockSpec(memory_space=pltpu.MemorySpace.VMEM)
        return pl.pallas_call(
            _resident_kernel,
            out_shape=jax.ShapeDtypeStruct((n, n_ch), out_dtype),
            in_specs=[vmem_spec] * 6,
            out_specs=vmem_spec,
            compiler_params=pltpu.CompilerParams(vmem_limit_bytes=vmem_limit),
        )(*args)

    # ---- Streaming fallback: W2T row blocks, column-tiled output. ---- #
    tn = _pick_col_tile(n_ch, half, n, prepared["vmem_cap"], max_col_tile)
    grid = (n_ch // tn,)
    est = (2 * (2 * half * n_ch * 2)      # W1 (default double buffer)
           + 3 * (tn * n_ch * 2)          # W2T row blocks (triple buffer)
           + 2 * (n * tn * 4 + tn * 4)    # output / b2 tiles
           + n * n_ch * 4                 # h scratch (f32)
           + n * (1 + 2 * half) * 8       # t, emb
           + 2 * n_ch * 4
           + (2 << 20))
    vmem_limit = int(min(max(est, 16 << 20), prepared["vmem_cap"]))

    return pl.pallas_call(
        _streaming_kernel,
        out_shape=jax.ShapeDtypeStruct((n, n_ch), out_dtype),
        grid_spec=pltpu.PrefetchScalarGridSpec(
            num_scalar_prefetch=0,
            grid=grid,
            in_specs=[
                # TODO(synk): the four constant inputs below could use
                # pl.Buffered(1) to halve their VMEM footprint.
                pl.BlockSpec((n, 1), lambda j: (0, 0)),             # t
                pl.BlockSpec((1, half), lambda j: (0, 0)),          # freqs
                pl.BlockSpec((2 * half, n_ch), lambda j: (0, 0)),   # W1 (resident)
                pl.BlockSpec((1, n_ch), lambda j: (0, 0)),          # b1
                _w2_block_spec(tn, n_ch),                           # W2T row block
                pl.BlockSpec((1, tn), lambda j: (0, j)),            # b2 block
            ],
            out_specs=pl.BlockSpec((n, tn), lambda j: (0, j)),
            scratch_shapes=[pltpu.VMEM((n, n_ch), jnp.float32)],
        ),
        # h_scratch written at j==0 is read by every later step -> sequential.
        # TODO(synk): on v7x, recompute h per core (W1 read is cheap) so this
        # axis can be split across both TensorCores.
        compiler_params=pltpu.CompilerParams(
            dimension_semantics=("arbitrary",),
            vmem_limit_bytes=vmem_limit,
        ),
    )(*args)


# --------------------------------------------------------------------------- #
# Parameter init and plain-JAX references
# --------------------------------------------------------------------------- #
def init_params(key, n_ch, frequency_embedding_size=256):
    """Deterministic synthetic params, stored as (in, out) for x @ W + b."""
    k1, k2, k3, k4 = jax.random.split(key, 4)
    f = frequency_embedding_size
    w1 = jax.random.normal(k1, (f, n_ch), jnp.float32) * (1.0 / math.sqrt(f))
    b1 = jax.random.normal(k2, (1, n_ch), jnp.float32) * 0.01
    w2 = jax.random.normal(k3, (n_ch, n_ch), jnp.float32) * (1.0 / math.sqrt(n_ch))
    b2 = jax.random.normal(k4, (1, n_ch), jnp.float32) * 0.01
    return w1, b1, w2, b2


def _timestep_embedding(t, dim, max_period=10000.0):
    half = dim // 2
    freqs = jnp.exp(-math.log(max_period)
                    * jnp.arange(half, dtype=jnp.float32) / half)
    args = t.astype(jnp.float32)[:, None] * freqs[None, :]
    emb = jnp.concatenate([jnp.cos(args), jnp.sin(args)], axis=-1)
    if dim % 2:
        emb = jnp.concatenate([emb, jnp.zeros_like(emb[:, :1])], axis=-1)
    return emb


def reference_f32(t, params, dim=256, max_period=10000.0):
    """Plain-JAX f32 mirror of the PyTorch forward."""
    w1, b1, w2, b2 = params
    emb = _timestep_embedding(t, dim, max_period)
    h = emb @ w1 + b1.reshape(1, -1)
    h = h * jax.nn.sigmoid(h)
    return h @ w2 + b2.reshape(1, -1)


def reference_matched(t, params, dim=256, max_period=10000.0):
    """Mirror of the kernel's precision choices (f32 layer-1, bf16 layer-2)."""
    w1, b1, w2, b2 = params
    emb = _timestep_embedding(t, dim, max_period)
    w1_q = w1.astype(jnp.bfloat16).astype(jnp.float32)
    h = emb @ w1_q + b1.reshape(1, -1)
    h = h * jax.nn.sigmoid(h)
    return jnp.dot(h.astype(jnp.bfloat16), w2.astype(jnp.bfloat16),
                   preferred_element_type=jnp.float32) + b2.reshape(1, -1)


# --------------------------------------------------------------------------- #
if __name__ == "__main__":
    N = 8          # one sublane tile of timesteps
    N_CH = 256     # lane-dense hidden size
    FREQ = 256     # module default frequency_embedding_size

    key = jax.random.PRNGKey(0)
    k_t, k_p = jax.random.split(key)
    # fractional timesteps in [0, 1000)
    t = jax.random.uniform(k_t, (N,), jnp.float32, minval=0.0, maxval=1000.0)
    params = init_params(k_p, N_CH, FREQ)

    ref_m = reference_matched(t, params, FREQ)
    ref_f = reference_f32(t, params, FREQ)

    # 1) Resident single-step path (the common case at these shapes).
    prep = prepare_params(params, FREQ)
    assert prep["resident"], "expected resident path for this small n_ch"
    out = jax.block_until_ready(timestep_embedder(t, prep))
    assert out.shape == (N, N_CH), out.shape
    assert jnp.allclose(out, ref_m, atol=2e-2, rtol=2e-2), \
        float(jnp.max(jnp.abs(out - ref_m)))
    assert jnp.allclose(out, ref_f, atol=5e-2, rtol=5e-2), \
        float(jnp.max(jnp.abs(out - ref_f)))

    # 2) Streaming fallback (forced; 128-wide tiles -> 2 grid steps exercised).
    prep_s = prepare_params(params, FREQ, force_streaming=True)
    out_s = jax.block_until_ready(timestep_embedder(t, prep_s, max_col_tile=128))
    assert out_s.shape == (N, N_CH), out_s.shape
    assert jnp.allclose(out_s, ref_m, atol=2e-2, rtol=2e-2), \
        float(jnp.max(jnp.abs(out_s - ref_m)))

    print("KERNEL_OK")
</pallas_src>

<mosaic_0001>
module attributes {stable_mosaic.version = 11 : i64} {
  func.func @_resident_kernel(%arg0: memref<8x1xf32, #tpu.memory_space<vmem>>, %arg1: memref<1x128xf32, #tpu.memory_space<vmem>>, %arg2: memref<256x256xbf16, #tpu.memory_space<vmem>>, %arg3: memref<1x256xf32, #tpu.memory_space<vmem>>, %arg4: memref<256x256xbf16, #tpu.memory_space<vmem>>, %arg5: memref<1x256xf32, #tpu.memory_space<vmem>>, %arg6: memref<8x256xf32, #tpu.memory_space<vmem>>) attributes {dimension_semantics = [], scalar_prefetch = 0 : i64, scratch_operands = 0 : i64, tpu.core_type = #tpu.core_type<tc>} {
    %c0 = arith.constant 0 : index
    %c0_0 = arith.constant 0 : index
    %0 = vector.load %arg0[%c0, %c0_0] : memref<8x1xf32, #tpu.memory_space<vmem>>, vector<8x1xf32>
    %c0_1 = arith.constant 0 : index
    %c0_2 = arith.constant 0 : index
    %1 = vector.load %arg1[%c0_1, %c0_2] : memref<1x128xf32, #tpu.memory_space<vmem>>, vector<1x128xf32>
    %2 = vector.broadcast %0 : vector<8x1xf32> to vector<8x128xf32>
    %3 = vector.broadcast %1 : vector<1x128xf32> to vector<8x128xf32>
    %4 = arith.mulf %2, %3 : vector<8x128xf32>
    %5 = math.cos %4 : vector<8x128xf32>
    %6 = math.sin %4 : vector<8x128xf32>
    %7 = tpu.concatenate %5, %6 in 1 : vector<8x128xf32>, vector<8x128xf32> -> vector<8x256xf32>
    %c0_3 = arith.constant 0 : index
    %c0_4 = arith.constant 0 : index
    %8 = vector.load %arg2[%c0_3, %c0_4] : memref<256x256xbf16, #tpu.memory_space<vmem>>, vector<256x256xbf16>
    %9 = arith.extf %8 : vector<256x256xbf16> to vector<256x256xf32>
    %cst = arith.constant dense<0.000000e+00> : vector<8x256xf32>
    %10 = tpu.matmul %7, %9, %cst {dimension_numbers = #tpu.dot_dimension_numbers<[1], [0], [0], [1], [0, 0, 1, 1], [], []>} : vector<8x256xf32>, vector<256x256xf32>, vector<8x256xf32> -> vector<8x256xf32>
    %c0_5 = arith.constant 0 : index
    %c0_6 = arith.constant 0 : index
    %11 = vector.load %arg3[%c0_5, %c0_6] : memref<1x256xf32, #tpu.memory_space<vmem>>, vector<1x256xf32>
    %12 = vector.broadcast %11 : vector<1x256xf32> to vector<8x256xf32>
    %13 = arith.addf %10, %12 : vector<8x256xf32>
    %14 = arith.negf %13 : vector<8x256xf32>
    %15 = math.exp %14 : vector<8x256xf32>
    %cst_7 = arith.constant 1.000000e+00 : f32
    %16 = vector.broadcast %cst_7 : f32 to vector<8x256xf32>
    %17 = arith.addf %16, %15 : vector<8x256xf32>
    %18 = arith.divf %16, %17 : vector<8x256xf32>
    %19 = arith.mulf %13, %18 : vector<8x256xf32>
    %20 = arith.truncf %19 : vector<8x256xf32> to vector<8x256xbf16>
    %c0_8 = arith.constant 0 : index
    %c0_9 = arith.constant 0 : index
    %21 = vector.load %arg4[%c0_8, %c0_9] : memref<256x256xbf16, #tpu.memory_space<vmem>>, vector<256x256xbf16>
    %cst_10 = arith.constant dense<0.000000e+00> : vector<8x256xf32>
    %22 = tpu.matmul %20, %21, %cst_10 {dimension_numbers = #tpu.dot_dimension_numbers<[1], [0], [0], [1], [0, 0, 1, 1], [], []>} : vector<8x256xbf16>, vector<256x256xbf16>, vector<8x256xf32> -> vector<8x256xf32>
    %c0_11 = arith.constant 0 : index
    %c0_12 = arith.constant 0 : index
    %23 = vector.load %arg5[%c0_11, %c0_12] : memref<1x256xf32, #tpu.memory_space<vmem>>, vector<1x256xf32>
    %24 = vector.broadcast %23 : vector<1x256xf32> to vector<8x256xf32>
    %25 = arith.addf %22, %24 : vector<8x256xf32>
    %c0_13 = arith.constant 0 : index
    %c0_14 = arith.constant 0 : index
    %26 = vector.load %arg6[%c0_13, %c0_14] : memref<8x256xf32, #tpu.memory_space<vmem>>, vector<8x256xf32>
    tpu.vector_store %arg6[%c0_13, %c0_14], %25 {strides = array<i32>} : memref<8x256xf32, #tpu.memory_space<vmem>>, vector<8x256xf32>,
    return
  }
}

</mosaic_0001>

<llo_original>
// kernel: tpu_custom_call.1
$region0: #{tpu_custom_call.1}
  #allocation0 [shape = 'u32[]', space=smem, size = 0x4, offset = 0x4, fixed_abs, tag = 'smem constant byte address 0x4 - core index']
  #allocation1 [shape = 'u32[72,128]{1,0:T(1,128)}', space=vmem, size = 0x9000, scoped, tag = 'internal scratch']
  %s0 = inlined_call_operand.vmem [shape: f32[8,1], index: 0, kind: input, shape index: {}]
  %s1 = inlined_call_operand.vmem [shape: f32[1,128], index: 1, kind: input, shape index: {}]
  %s2 = inlined_call_operand.hbm [shape: bf16[256,256], index: 2, kind: input, shape index: {}]
  %s3 = inlined_call_operand.vmem [shape: f32[1,256], index: 3, kind: input, shape index: {}]
  %s4 = inlined_call_operand.hbm [shape: bf16[256,256], index: 4, kind: input, shape index: {}]
  %s5 = inlined_call_operand.vmem [shape: f32[1,256], index: 5, kind: input, shape index: {}]
  %s6 = inlined_call_operand.hbm [shape: f32[8,256], index: 6, kind: output, shape index: {}]
  %s7 = sld [smem:[#allocation0]]
  $region42: #{tpu_custom_call.1} parent=0
    _
  %s9 = ssub.s32 1, %s7
  %s10 = scalar_select 0, %s9, %s7
  $region1: #{tpu_custom_call.1} parent=0
    #allocation2 [shape = 'u8[131072]{0}', space=vmem, size = 0x20000, scoped, tag = 'input window, operand 2, single buffered']
    #allocation3 [shape = 's32[1]{0}', space=sflag, size = 0x4, scoped, tag = 'scoped memory for tpu_custom_call.1']
    #allocation4 [shape = 's32[1]{0}', space=sflag, size = 0x4, scoped, tag = 'scoped memory for tpu_custom_call.1']
    #allocation5 [shape = 'u8[131072]{0}', space=vmem, size = 0x20000, scoped, tag = 'input window, operand 4, single buffered']
    #allocation6 [shape = 's32[1]{0}', space=sflag, size = 0x4, scoped, tag = 'scoped memory for tpu_custom_call.1']
    #allocation7 [shape = 'u8[8192]{0}', space=vmem, size = 0x2000, scoped, tag = 'output window, operand 0, single buffered']
    %11 = vsyncpa [#allocation3], 0
    %12 = vsyncpa [#allocation6], 0
    %13 = vsyncpa [#allocation4], 0
    // Predicated region
    $region2: #{tpu_custom_call.1} parent=1 // pred_check
      _
    $region3: #{tpu_custom_call.1} parent=1 // pred_check_branch
      %15 = sbr.rel (0) target = $region5
    $region4: #{tpu_custom_call.1} parent=1 // pred_region
      _
    $region5: #{tpu_custom_call.1} parent=1 // pred_fallthru
      _
    // Predicated region
    $region6: #{tpu_custom_call.1} parent=1 // pred_check
      _
    $region7: #{tpu_custom_call.1} parent=1 // pred_check_branch
      %17 = sbr.rel (0) target = $region9
    $region8: #{tpu_custom_call.1} parent=1 // pred_region
      _
    $region9: #{tpu_custom_call.1} parent=1 // pred_fallthru
      _
    // Predicated region
    $region10: #{tpu_custom_call.1} parent=1 // pred_check
      _
    $region11: #{tpu_custom_call.1} parent=1 // pred_check_branch
      %19 = sbr.rel (0) target = $region13
    $region12: #{tpu_custom_call.1} parent=1 // pred_region
      %21 = vsyncadd [#allocation3], 0
      %s22 = sshll.u32 %s2, 4
      %s23 = int_to_ptr.hbm [resolvable:$true] %s22
      %s24 = sshll.u32 [#allocation2], 4
      %s25 = int_to_ptr.vmem [resolvable:$true] %s24
      %30 = dma.hbm_to_vmem [thread:$0]  %s23, 4096, %s25, [#allocation3], 128, 128, 8
    $region13: #{tpu_custom_call.1} parent=1 // pred_fallthru
      _
    // Predicated region
    $region14: #{tpu_custom_call.1} parent=1 // pred_check
      _
    $region15: #{tpu_custom_call.1} parent=1 // pred_check_branch
      %32 = sbr.rel (0) target = $region17
    $region16: #{tpu_custom_call.1} parent=1 // pred_region
      _
    $region17: #{tpu_custom_call.1} parent=1 // pred_fallthru
      _
    // Predicated region
    $region18: #{tpu_custom_call.1} parent=1 // pred_check
      _
    $region19: #{tpu_custom_call.1} parent=1 // pred_check_branch
      %34 = sbr.rel (0) target = $region21
    $region20: #{tpu_custom_call.1} parent=1 // pred_region
      %36 = vsyncadd [#allocation6], 0
      %s37 = sshll.u32 %s4, 4
      %s38 = int_to_ptr.hbm [resolvable:$true] %s37
      %s39 = sshll.u32 [#allocation5], 4
      %s40 = int_to_ptr.vmem [resolvable:$true] %s39
      %45 = dma.hbm_to_vmem [thread:$0]  %s38, 4096, %s40, [#allocation6], 128, 128, 8
    $region21: #{tpu_custom_call.1} parent=1 // pred_fallthru
      _
    // Predicated region
    $region22: #{tpu_custom_call.1} parent=1 // pred_check
      _
    $region23: #{tpu_custom_call.1} parent=1 // pred_check_branch
      %47 = sbr.rel (0) target = $region25
    $region24: #{tpu_custom_call.1} parent=1 // pred_region
      _
    $region25: #{tpu_custom_call.1} parent=1 // pred_fallthru
      _
    // Predicated region
    $region26: #{tpu_custom_call.1} parent=1 // pred_check
      _
    $region27: #{tpu_custom_call.1} parent=1 // pred_check_branch
      %49 = sbr.rel (0) target = $region29
    $region28: #{tpu_custom_call.1} parent=1 // pred_region
      %51 = dma.done [#allocation3], 4096
    $region29: #{tpu_custom_call.1} parent=1 // pred_fallthru
      _
    // Predicated region
    $region30: #{tpu_custom_call.1} parent=1 // pred_check
      _
    $region31: #{tpu_custom_call.1} parent=1 // pred_check_branch
      %53 = sbr.rel (0) target = $region33
    $region32: #{tpu_custom_call.1} parent=1 // pred_region
      %55 = dma.done [#allocation6], 4096
    $region33: #{tpu_custom_call.1} parent=1 // pred_fallthru
      _
    %v56 = vld [vmem:[%s0] sm:$0xff]
    %v57 = vld [vmem:[%s1] sm:$0x1]
    %59 = vset.pattern.permute.xlu0 0
    %60 = vperm.xlu0 %59, %v56
    %v61 = vpop.permute.xlu0 %60
    %v64 = vperm.slane %v57, 0
    %v66 = vmul.f32 %v61, %v64
    %v67 = vand.u32 2147483647, %v66
    %vm68 = vcmp.le.f32.partialorder %v67, 0.7853982
    %vm69 = vcmp.lt.s32.totalorder %v66, 0
    %v70 = vand.u32 %v66, 2139095040
    %v71 = vshrl.u32 %v70, 23
    %v72 = vsub.s32 %v71, 127
    %v73 = vand.u32 2147483647, %v66
    %v74 = vand.u32 %v73, 8388607
    %v75 = vor.u32 %v74, 8388608
    %v76 = vsub.s32 0, %v75
    %v77 = vadd.s32 %v72, 1
    %vm78 = vcmp.gt.s32.totalorder %v77, 0
    %v79 = vsel %vm78, %v77, 0
    %v80 = vshrl.u32 %v79, 5
    %v81 = vand.u32 %v79, 31
    %v82 = vsub.s32 32, %v81
    %v83 = vshrl.u32 683565275, %v82
    %v84 = vshll.u32 683565275, %v81
    %v85 = vshrl.u32 2475754826, %v82
    %v86 = vor.u32 %v84, %v85
    %v87 = vshll.u32 2475754826, %v81
    %v88 = vshrl.u32 2131351028, %v82
    %v89 = vor.u32 %v87, %v88
    %v90 = vshll.u32 2131351028, %v81
    %v91 = vshrl.u32 2102212464, %v82
    %v92 = vor.u32 %v90, %v91
    %v93 = vshll.u32 2102212464, %v81
    %v94 = vshrl.u32 920167782, %v82
    %v95 = vor.u32 %v93, %v94
    %v96 = vshll.u32 920167782, %v81
    %v97 = vshrl.u32 1326507024, %v82
    %v98 = vor.u32 %v96, %v97
    %vm99 = vcmp.lt.s32.totalorder %v80, 1
    %vm100 = vcmp.lt.s32.totalorder %v80, 2
    %vm101 = vcmp.lt.s32.totalorder %v80, 3
    %vm102 = vcmp.lt.s32.totalorder %v80, 4
    %v103 = vsel %vm99, %v83, %v86
    %v104 = vsel %vm102, %v92, 2102212464
    %v105 = vsel %vm101, %v89, %v104
    %v106 = vsel %vm100, %v103, %v105
    %v107 = vsel %vm99, %v86, %v89
    %v108 = vsel %vm102, %v95, 920167782
    %v109 = vsel %vm101, %v92, %v108
    %v110 = vsel %vm100, %v107, %v109
    %v111 = vsel %vm99, %v89, %v92
    %v112 = vsel %vm102, %v98, 1326507024
    %v113 = vsel %vm101, %v95, %v112
    %v114 = vsel %vm100, %v111, %v113
    %v115 = vshll.u32 %v75, 8
    %v116 = vand.u32 %v115, 65535
    %v117 = vshrl.u32 %v115, 16
    %v118 = vand.u32 %v114, 65535
    %v119 = vshrl.u32 %v114, 16
    %v120 = vmul.u32 %v116, %v118
    %v121 = vmul.u32 %v116, %v119
    %v122 = vmul.u32 %v117, %v118
    %v123 = vmul.u32 %v117, %v119
    %v124 = vshll.u32 %v121, 16
    %v125 = vshrl.u32 %v121, 16
    %v126 = vshll.u32 %v122, 16
    %v127 = vshrl.u32 %v122, 16
    %vm128 = vc.u32 %v120, %v124
    %v129 = vsel %vm128, 1, 0
    %v130 = vadd.s32 %v120, %v124
    %v131 = vadd.s32 %v123, %v129
    %vm132 = vc.u32 %v130, %v126
    %v133 = vsel %vm132, 1, 0
    %v134 = vadd.s32 %v130, %v126
    %v135 = vadd.s32 %v131, %v133
    %v136 = vadd.s32 %v135, %v125
    %v137 = vadd.s32 %v136, %v127
    %v138 = vand.u32 %v115, 65535
    %v139 = vshrl.u32 %v115, 16
    %v140 = vand.u32 %v110, 65535
    %v141 = vshrl.u32 %v110, 16
    %v142 = vmul.u32 %v138, %v140
    %v143 = vmul.u32 %v138, %v141
    %v144 = vmul.u32 %v139, %v140
    %v145 = vmul.u32 %v139, %v141
    %v146 = vshll.u32 %v143, 16
    %v147 = vshrl.u32 %v143, 16
    %v148 = vshll.u32 %v144, 16
    %v149 = vshrl.u32 %v144, 16
    %vm150 = vc.u32 %v142, %v146
    %v151 = vsel %vm150, 1, 0
    %v152 = vadd.s32 %v142, %v146
    %v153 = vadd.s32 %v145, %v151
    %vm154 = vc.u32 %v152, %v148
    %v155 = vsel %vm154, 1, 0
    %v156 = vadd.s32 %v152, %v148
    %v157 = vadd.s32 %v153, %v155
    %v158 = vadd.s32 %v157, %v147
    %v159 = vadd.s32 %v158, %v149
    %v160 = vmul.u32 %v115, %v106
    %v161 = vadd.s32 %v137, %v156
    %vm162 = vc.u32 %v137, %v156
    %v163 = vadd.s32 %v159, 1
    %v164 = vsel %vm162, %v163, %v159
    %v165 = vadd.s32 %v160, %v164
    %v166 = vadd.s32 %v165, 536870912
    %v167 = vshrl.u32 %v166, 30
    %v168 = vshll.u32 %v167, 30
    %v169 = vsub.s32 %v165, %v168
    %vm170 = vcmp.lt.s32.totalorder %v169, 0
    %v171 = vsub.s32 0, %v169
    %v172 = vsel %vm170, %v171, %v169
    %v173 = vclz %v172
    %v174 = vsub.s32 %v173, 2
    %vm175 = vcmp.gt.s32.totalorder 0, %v174
    %v176 = vsel %vm175, 0, %v174
    %v177 = vsub.s32 32, %v176
    %v178 = vshll.u32 %v169, %v176
    %v179 = vshrl.u32 %v161, %v177
    %v180 = vor.u32 %v178, %v179
    %v181 = vsub.s32 4294967266, %v176
    %v182 = vadd.s32 %v181, 127
    %v183 = vshll.u32 %v182, 23
    %v184 = vor.u32 4788187, %v183
    %v185 = vand.u32 2147483647, %v184
    %v187 = vcvt.s32.f32 %v180
    %v188 = vmul.f32 %v187, %v185
    %v189 = vxor.u32 %v188, 2147483648
    %v190 = vsel %vm69, %v189, %v188
    %v191 = vsub.s32 4, %v167
    %v192 = vsel %vm69, %v191, %v167
    %v193 = vsel %vm68, %v66, %v190
    %v194 = vsel %vm68, 0, %v192
    %v195 = vmul.f32 %v193, %v193
    %v196 = vmul.f32 %v195, -0.001358992
    %v197 = vadd.f32 %v196, 0.041655596
    %v198 = vmul.f32 %v195, %v197
    %v199 = vadd.f32 %v198, -0.4999988
    %v200 = vmul.f32 %v195, %v199
    %v201 = vadd.f32 1.0, %v200
    %v202 = vmul.f32 %v193, %v193
    %v203 = vmul.f32 %v202, -0.00019511016
    %v204 = vadd.f32 %v203, 0.008332121
    %v205 = vmul.f32 %v202, %v204
    %v206 = vadd.f32 %v205, -0.16666654
    %v207 = vmul.f32 %v202, %v206
    %v208 = vadd.f32 %v207, 1.0
    %v209 = vmul.f32 %v208, %v193
    %vm210 = vweird.f32 %v66
    %v211 = vand.u32 %v194, 3
    %vm212 = vcmp.lt.s32.totalorder %v211, 2
    %vm213 = vcmp.eq.s32.totalorder %v211, 0
    %v214 = vxor.u32 %v209, 2147483648
    %v215 = vsel %vm213, %v201, %v214
    %vm216 = vcmp.eq.s32.totalorder %v211, 2
    %v217 = vxor.u32 %v201, 2147483648
    %v218 = vsel %vm216, %v217, %v209
    %v219 = vsel %vm212, %v215, %v218
    %v220 = vsel %vm210, nan, %v219
    %v221 = vand.u32 2147483647, %v66
    %vm222 = vcmp.le.f32.partialorder %v221, 0.7853982
    %vm223 = vcmp.lt.s32.totalorder %v66, 0
    %v224 = vand.u32 %v66, 2139095040
    %v225 = vshrl.u32 %v224, 23
    %v226 = vsub.s32 %v225, 127
    %v227 = vand.u32 2147483647, %v66
    %v228 = vand.u32 %v227, 8388607
    %v229 = vor.u32 %v228, 8388608
    %v230 = vsub.s32 0, %v229
    %v231 = vadd.s32 %v226, 1
    %vm232 = vcmp.gt.s32.totalorder %v231, 0
    %v233 = vsel %vm232, %v231, 0
    %v234 = vshrl.u32 %v233, 5
    %v235 = vand.u32 %v233, 31
    %v236 = vsub.s32 32, %v235
    %v237 = vshrl.u32 683565275, %v236
    %v238 = vshll.u32 683565275, %v235
    %v239 = vshrl.u32 2475754826, %v236
    %v240 = vor.u32 %v238, %v239
    %v241 = vshll.u32 2475754826, %v235
    %v242 = vshrl.u32 2131351028, %v236
    %v243 = vor.u32 %v241, %v242
    %v244 = vshll.u32 2131351028, %v235
    %v245 = vshrl.u32 2102212464, %v236
    %v246 = vor.u32 %v244, %v245
    %v247 = vshll.u32 2102212464, %v235
    %v248 = vshrl.u32 920167782, %v236
    %v249 = vor.u32 %v247, %v248
    %v250 = vshll.u32 920167782, %v235
    %v251 = vshrl.u32 1326507024, %v236
    %v252 = vor.u32 %v250, %v251
    %vm253 = vcmp.lt.s32.totalorder %v234, 1
    %vm254 = vcmp.lt.s32.totalorder %v234, 2
    %vm255 = vcmp.lt.s32.totalorder %v234, 3
    %vm256 = vcmp.lt.s32.totalorder %v234, 4
    %v257 = vsel %vm253, %v237, %v240
    %v258 = vsel %vm256, %v246, 2102212464
    %v259 = vsel %vm255, %v243, %v258
    %v260 = vsel %vm254, %v257, %v259
    %v261 = vsel %vm253, %v240, %v243
    %v262 = vsel %vm256, %v249, 920167782
    %v263 = vsel %vm255, %v246, %v262
    %v264 = vsel %vm254, %v261, %v263
    %v265 = vsel %vm253, %v243, %v246
    %v266 = vsel %vm256, %v252, 1326507024
    %v267 = vsel %vm255, %v249, %v266
    %v268 = vsel %vm254, %v265, %v267
    %v269 = vshll.u32 %v229, 8
    %v270 = vand.u32 %v269, 65535
    %v271 = vshrl.u32 %v269, 16
    %v272 = vand.u32 %v268, 65535
    %v273 = vshrl.u32 %v268, 16
    %v274 = vmul.u32 %v270, %v272
    %v275 = vmul.u32 %v270, %v273
    %v276 = vmul.u32 %v271, %v272
    %v277 = vmul.u32 %v271, %v273
    %v278 = vshll.u32 %v275, 16
    %v279 = vshrl.u32 %v275, 16
    %v280 = vshll.u32 %v276, 16
    %v281 = vshrl.u32 %v276, 16
    %vm282 = vc.u32 %v274, %v278
    %v283 = vsel %vm282, 1, 0
    %v284 = vadd.s32 %v274, %v278
    %v285 = vadd.s32 %v277, %v283
    %vm286 = vc.u32 %v284, %v280
    %v287 = vsel %vm286, 1, 0
    %v288 = vadd.s32 %v284, %v280
    %v289 = vadd.s32 %v285, %v287
    %v290 = vadd.s32 %v289, %v279
    %v291 = vadd.s32 %v290, %v281
    %v292 = vand.u32 %v269, 65535
    %v293 = vshrl.u32 %v269, 16
    %v294 = vand.u32 %v264, 65535
    %v295 = vshrl.u32 %v264, 16
    %v296 = vmul.u32 %v292, %v294
    %v297 = vmul.u32 %v292, %v295
    %v298 = vmul.u32 %v293, %v294
    %v299 = vmul.u32 %v293, %v295
    %v300 = vshll.u32 %v297, 16
    %v301 = vshrl.u32 %v297, 16
    %v302 = vshll.u32 %v298, 16
    %v303 = vshrl.u32 %v298, 16
    %vm304 = vc.u32 %v296, %v300
    %v305 = vsel %vm304, 1, 0
    %v306 = vadd.s32 %v296, %v300
    %v307 = vadd.s32 %v299, %v305
    %vm308 = vc.u32 %v306, %v302
    %v309 = vsel %vm308, 1, 0
    %v310 = vadd.s32 %v306, %v302
    %v311 = vadd.s32 %v307, %v309
    %v312 = vadd.s32 %v311, %v301
    %v313 = vadd.s32 %v312, %v303
    %v314 = vmul.u32 %v269, %v260
    %v315 = vadd.s32 %v291, %v310
    %vm316 = vc.u32 %v291, %v310
    %v317 = vadd.s32 %v313, 1
    %v318 = vsel %vm316, %v317, %v313
    %v319 = vadd.s32 %v314, %v318
    %v320 = vadd.s32 %v319, 536870912
    %v321 = vshrl.u32 %v320, 30
    %v322 = vshll.u32 %v321, 30
    %v323 = vsub.s32 %v319, %v322
    %vm324 = vcmp.lt.s32.totalorder %v323, 0
    %v325 = vsub.s32 0, %v323
    %v326 = vsel %vm324, %v325, %v323
    %v327 = vclz %v326
    %v328 = vsub.s32 %v327, 2
    %vm329 = vcmp.gt.s32.totalorder 0, %v328
    %v330 = vsel %vm329, 0, %v328
    %v331 = vsub.s32 32, %v330
    %v332 = vshll.u32 %v323, %v330
    %v333 = vshrl.u32 %v315, %v331
    %v334 = vor.u32 %v332, %v333
    %v335 = vsub.s32 4294967266, %v330
    %v336 = vadd.s32 %v335, 127
    %v337 = vshll.u32 %v336, 23
    %v338 = vor.u32 4788187, %v337
    %v339 = vand.u32 2147483647, %v338
    %v341 = vcvt.s32.f32 %v334
    %v342 = vmul.f32 %v341, %v339
    %v343 = vxor.u32 %v342, 2147483648
    %v344 = vsel %vm223, %v343, %v342
    %v345 = vsub.s32 4, %v321
    %v346 = vsel %vm223, %v345, %v321
    %v347 = vsel %vm222, %v66, %v344
    %v348 = vsel %vm222, 0, %v346
    %v349 = vmul.f32 %v347, %v347
    %v350 = vmul.f32 %v349, -0.001358992
    %v351 = vadd.f32 %v350, 0.041655596
    %v352 = vmul.f32 %v349, %v351
    %v353 = vadd.f32 %v352, -0.4999988
    %v354 = vmul.f32 %v349, %v353
    %v355 = vadd.f32 1.0, %v354
    %v356 = vmul.f32 %v347, %v347
    %v357 = vmul.f32 %v356, -0.00019511016
    %v358 = vadd.f32 %v357, 0.008332121
    %v359 = vmul.f32 %v356, %v358
    %v360 = vadd.f32 %v359, -0.16666654
    %v361 = vmul.f32 %v356, %v360
    %v362 = vadd.f32 %v361, 1.0
    %v363 = vmul.f32 %v362, %v347
    %vm364 = vweird.f32 %v66
    %v365 = vadd.s32 %v348, 3
    %v366 = vand.u32 %v365, 3
    %vm367 = vcmp.lt.s32.totalorder %v366, 2
    %vm368 = vcmp.eq.s32.totalorder %v366, 0
    %v369 = vxor.u32 %v363, 2147483648
    %v370 = vsel %vm368, %v355, %v369
    %vm371 = vcmp.eq.s32.totalorder %v366, 2
    %v372 = vxor.u32 %v355, 2147483648
    %v373 = vsel %vm371, %v372, %v363
    %v374 = vsel %vm367, %v370, %v373
    %v375 = vsel %vm364, nan, %v374
    %v376 = vld [vmem:[#allocation2] sm:$0xff]
    %v377 = vld [vmem:[#allocation2 + $0x8] sm:$0xff]
    %v378 = vld [vmem:[#allocation2 + $0x10] sm:$0xff]
    %v379 = vld [vmem:[#allocation2 + $0x18] sm:$0xff]
    %v380 = vld [vmem:[#allocation2 + $0x20] sm:$0xff]
    %v381 = vld [vmem:[#allocation2 + $0x28] sm:$0xff]
    %v382 = vld [vmem:[#allocation2 + $0x30] sm:$0xff]
    %v383 = vld [vmem:[#allocation2 + $0x38] sm:$0xff]
    %v384 = vld [vmem:[#allocation2 + $0x40] sm:$0xff]
    %v385 = vld [vmem:[#allocation2 + $0x48] sm:$0xff]
    %v386 = vld [vmem:[#allocation2 + $0x50] sm:$0xff]
    %v387 = vld [vmem:[#allocation2 + $0x58] sm:$0xff]
    %v388 = vld [vmem:[#allocation2 + $0x60] sm:$0xff]
    %v389 = vld [vmem:[#allocation2 + $0x68] sm:$0xff]
    %v390 = vld [vmem:[#allocation2 + $0x70] sm:$0xff]
    %v391 = vld [vmem:[#allocation2 + $0x78] sm:$0xff]
    %v392 = vld [vmem:[#allocation2 + $0x80] sm:$0xff]
    %v393 = vld [vmem:[#allocation2 + $0x88] sm:$0xff]
    %v394 = vld [vmem:[#allocation2 + $0x90] sm:$0xff]
    %v395 = vld [vmem:[#allocation2 + $0x98] sm:$0xff]
    %v396 = vld [vmem:[#allocation2 + $0xa0] sm:$0xff]
    %v397 = vld [vmem:[#allocation2 + $0xa8] sm:$0xff]
    %v398 = vld [vmem:[#allocation2 + $0xb0] sm:$0xff]
    %v399 = vld [vmem:[#allocation2 + $0xb8] sm:$0xff]
    %v400 = vld [vmem:[#allocation2 + $0xc0] sm:$0xff]
    %v401 = vld [vmem:[#allocation2 + $0xc8] sm:$0xff]
    %v402 = vld [vmem:[#allocation2 + $0xd0] sm:$0xff]
    %v403 = vld [vmem:[#allocation2 + $0xd8] sm:$0xff]
    %v404 = vld [vmem:[#allocation2 + $0xe0] sm:$0xff]
    %v405 = vld [vmem:[#allocation2 + $0xe8] sm:$0xff]
    %v406 = vld [vmem:[#allocation2 + $0xf0] sm:$0xff]
    %v407 = vld [vmem:[#allocation2 + $0xf8] sm:$0xff]
    %v408 = vunpack.c.l.bf16 %v376
    %v409 = vunpack.c.h.bf16 %v376
    %v410 = vunpack.c.l.bf16 %v377
    %v411 = vunpack.c.h.bf16 %v377
    %v412 = vunpack.c.l.bf16 %v378
    %v413 = vunpack.c.h.bf16 %v378
    %v414 = vunpack.c.l.bf16 %v379
    %v415 = vunpack.c.h.bf16 %v379
    %v416 = vunpack.c.l.bf16 %v380
    %v417 = vunpack.c.h.bf16 %v380
    %v418 = vunpack.c.l.bf16 %v381
    %v419 = vunpack.c.h.bf16 %v381
    %v420 = vunpack.c.l.bf16 %v382
    %v421 = vunpack.c.h.bf16 %v382
    %v422 = vunpack.c.l.bf16 %v383
    %v423 = vunpack.c.h.bf16 %v383
    %v424 = vunpack.c.l.bf16 %v384
    %v425 = vunpack.c.h.bf16 %v384
    %v426 = vunpack.c.l.bf16 %v385
    %v427 = vunpack.c.h.bf16 %v385
    %v428 = vunpack.c.l.bf16 %v386
    %v429 = vunpack.c.h.bf16 %v386
    %v430 = vunpack.c.l.bf16 %v387
    %v431 = vunpack.c.h.bf16 %v387
    %v432 = vunpack.c.l.bf16 %v388
    %v433 = vunpack.c.h.bf16 %v388
    %v434 = vunpack.c.l.bf16 %v389
    %v435 = vunpack.c.h.bf16 %v389
    %v436 = vunpack.c.l.bf16 %v390
    %v437 = vunpack.c.h.bf16 %v390
    %v438 = vunpack.c.l.bf16 %v391
    %v439 = vunpack.c.h.bf16 %v391
    %v440 = vunpack.c.l.bf16 %v392
    %v441 = vunpack.c.h.bf16 %v392
    %v442 = vunpack.c.l.bf16 %v393
    %v443 = vunpack.c.h.bf16 %v393
    %v444 = vunpack.c.l.bf16 %v394
    %v445 = vunpack.c.h.bf16 %v394
    %v446 = vunpack.c.l.bf16 %v395
    %v447 = vunpack.c.h.bf16 %v395
    %v448 = vunpack.c.l.bf16 %v396
    %v449 = vunpack.c.h.bf16 %v396
    %v450 = vunpack.c.l.bf16 %v397
    %v451 = vunpack.c.h.bf16 %v397
    %v452 = vunpack.c.l.bf16 %v398
    %v453 = vunpack.c.h.bf16 %v398
    %v454 = vunpack.c.l.bf16 %v399
    %v455 = vunpack.c.h.bf16 %v399
    %v456 = vunpack.c.l.bf16 %v400
    %v457 = vunpack.c.h.bf16 %v400
    %v458 = vunpack.c.l.bf16 %v401
    %v459 = vunpack.c.h.bf16 %v401
    %v460 = vunpack.c.l.bf16 %v402
    %v461 = vunpack.c.h.bf16 %v402
    %v462 = vunpack.c.l.bf16 %v403
    %v463 = vunpack.c.h.bf16 %v403
    %v464 = vunpack.c.l.bf16 %v404
    %v465 = vunpack.c.h.bf16 %v404
    %v466 = vunpack.c.l.bf16 %v405
    %v467 = vunpack.c.h.bf16 %v405
    %v468 = vunpack.c.l.bf16 %v406
    %v469 = vunpack.c.h.bf16 %v406
    %v470 = vunpack.c.l.bf16 %v407
    %v471 = vunpack.c.h.bf16 %v407
    %v472 = vld [vmem:[%s3] sm:$0x3]
    %v474 = vperm.slane %v472, 0
    %v475 = vperm.slane %v472, 1
    %478 = vmatpush.msra.mxu0 %v438
    %479 = vmatpush.msra.mxu0 %v436
    %480 = vmatpush.msra.mxu0 %v434
    %481 = vmatpush.msra.mxu0 %v432
    %482 = vmatpush.msra.mxu0 %v430
    %483 = vmatpush.msra.mxu0 %v428
    %484 = vmatpush.msra.mxu0 %v426
    %485 = vmatpush.msra.mxu0 %v424
    %486 = vmatpush.msra.mxu0 %v422
    %487 = vmatpush.msra.mxu0 %v420
    %488 = vmatpush.msra.mxu0 %v418
    %489 = vmatpush.msra.mxu0 %v416
    %490 = vmatpush.msra.mxu0 %v414
    %491 = vmatpush.msra.mxu0 %v412
    %492 = vmatpush.msra.mxu0 %v410
    %493 = vmatpush.msra.mxu0 %v408
    %494 = vmatmul.f32.gmra.mxu0 %v220
    %v495 = vpop.f32.mrf.mxu0
    %v496 = vadd.f32 %v474, %v495
    %497 = vdwg.mxu0
    %498 = vmatpush.msra.mxu0 %v470
    %499 = vmatpush.msra.mxu0 %v468
    %500 = vmatpush.msra.mxu0 %v466
    %501 = vmatpush.msra.mxu0 %v464
    %502 = vmatpush.msra.mxu0 %v462
    %503 = vmatpush.msra.mxu0 %v460
    %504 = vmatpush.msra.mxu0 %v458
    %505 = vmatpush.msra.mxu0 %v456
    %506 = vmatpush.msra.mxu0 %v454
    %507 = vmatpush.msra.mxu0 %v452
    %508 = vmatpush.msra.mxu0 %v450
    %509 = vmatpush.msra.mxu0 %v448
    %510 = vmatpush.msra.mxu0 %v446
    %511 = vmatpush.msra.mxu0 %v444
    %512 = vmatpush.msra.mxu0 %v442
    %513 = vmatpush.msra.mxu0 %v440
    %514 = vmatmul.f32.gmra.mxu0 %v375
    %v515 = vpop.f32.mrf.mxu0
    %v516 = vadd.f32 %v496, %v515
    %517 = vdwg.mxu0
    %518 = vmatpush.msra.mxu0 %v439
    %519 = vmatpush.msra.mxu0 %v437
    %520 = vmatpush.msra.mxu0 %v435
    %521 = vmatpush.msra.mxu0 %v433
    %522 = vmatpush.msra.mxu0 %v431
    %523 = vmatpush.msra.mxu0 %v429
    %524 = vmatpush.msra.mxu0 %v427
    %525 = vmatpush.msra.mxu0 %v425
    %526 = vmatpush.msra.mxu0 %v423
    %527 = vmatpush.msra.mxu0 %v421
    %528 = vmatpush.msra.mxu0 %v419
    %529 = vmatpush.msra.mxu0 %v417
    %530 = vmatpush.msra.mxu0 %v415
    %531 = vmatpush.msra.mxu0 %v413
    %532 = vmatpush.msra.mxu0 %v411
    %533 = vmatpush.msra.mxu0 %v409
    %534 = vmatmul.f32.gmra.mxu0 %v220
    %v535 = vpop.f32.mrf.mxu0
    %v536 = vadd.f32 %v475, %v535
    %537 = vdwg.mxu0
    %538 = vmatpush.msra.mxu0 %v471
    %539 = vmatpush.msra.mxu0 %v469
    %540 = vmatpush.msra.mxu0 %v467
    %541 = vmatpush.msra.mxu0 %v465
    %542 = vmatpush.msra.mxu0 %v463
    %543 = vmatpush.msra.mxu0 %v461
    %544 = vmatpush.msra.mxu0 %v459
    %545 = vmatpush.msra.mxu0 %v457
    %546 = vmatpush.msra.mxu0 %v455
    %547 = vmatpush.msra.mxu0 %v453
    %548 = vmatpush.msra.mxu0 %v451
    %549 = vmatpush.msra.mxu0 %v449
    %550 = vmatpush.msra.mxu0 %v447
    %551 = vmatpush.msra.mxu0 %v445
    %552 = vmatpush.msra.mxu0 %v443
    %553 = vmatpush.msra.mxu0 %v441
    %554 = vmatmul.f32.gmra.mxu0 %v375
    %v555 = vpop.f32.mrf.mxu0
    %v556 = vadd.f32 %v536, %v555
    %557 = vdwg.mxu0
    %v558 = vxor.u32 %v516, 2147483648
    %v559 = vxor.u32 %v556, 2147483648
    %v560 = vmul.f32 %v558, 1.442695
    %v561 = vpow.pop %v560
    %v562 = vmul.f32 %v559, 1.442695
    %v563 = vpow.pop %v562
    %v564 = vadd.f32 %v561, 1.0
    %v565 = vadd.f32 %v563, 1.0
    %v566 = vrcp.pop %v564
    %v567 = vmul.f32 %v564, %v566
    %v568 = vsub.f32 1.0, %v567
    %v569 = vmul.f32 %v566, %v568
    %v570 = vadd.f32 %v566, %v569
    %vm571 = vweird.f32 %v564
    %vm572 = vweird.f32 %v566
    %vm573 = vmor %vm571, %vm572
    %v574 = vsel %vm573, %v566, %v570
    %v575 = vand.u32 2147483647, %v564
    %vm576 = vcmp.eq.f32.partialorder %v575, 8.507059e+37
    %v577 = vand.u32 %v564, 2147483648
    %v578 = vor.u32 1.1754944e-38, %v577
    %v579 = vsel %vm576, %v578, %v574
    %v580 = vmul.f32 1.0, %v579
    %v581 = vrcp.pop %v565
    %v582 = vmul.f32 %v565, %v581
    %v583 = vsub.f32 1.0, %v582
    %v584 = vmul.f32 %v581, %v583
    %v585 = vadd.f32 %v581, %v584
    %vm586 = vweird.f32 %v565
    %vm587 = vweird.f32 %v581
    %vm588 = vmor %vm586, %vm587
    %v589 = vsel %vm588, %v581, %v585
    %v590 = vand.u32 2147483647, %v565
    %vm591 = vcmp.eq.f32.partialorder %v590, 8.507059e+37
    %v592 = vand.u32 %v565, 2147483648
    %v593 = vor.u32 1.1754944e-38, %v592
    %v594 = vsel %vm591, %v593, %v589
    %v595 = vmul.f32 1.0, %v594
    %v596 = vmul.f32 %v516, %v580
    %v597 = vmul.f32 %v556, %v595
    %v598 = vpack.c.bf16 %v596, %v596
    %v599 = vpack.c.bf16 %v597, %v597
    %v600 = vld [vmem:[#allocation5] sm:$0xff]
    %v601 = vld [vmem:[#allocation5 + $0x8] sm:$0xff]
    %v602 = vld [vmem:[#allocation5 + $0x10] sm:$0xff]
    %v603 = vld [vmem:[#allocation5 + $0x18] sm:$0xff]
    %v604 = vld [vmem:[#allocation5 + $0x20] sm:$0xff]
    %v605 = vld [vmem:[#allocation5 + $0x28] sm:$0xff]
    %v606 = vld [vmem:[#allocation5 + $0x30] sm:$0xff]
    %v607 = vld [vmem:[#allocation5 + $0x38] sm:$0xff]
    %v608 = vld [vmem:[#allocation5 + $0x40] sm:$0xff]
    %v609 = vld [vmem:[#allocation5 + $0x48] sm:$0xff]
    %v610 = vld [vmem:[#allocation5 + $0x50] sm:$0xff]
    %v611 = vld [vmem:[#allocation5 + $0x58] sm:$0xff]
    %v612 = vld [vmem:[#allocation5 + $0x60] sm:$0xff]
    %v613 = vld [vmem:[#allocation5 + $0x68] sm:$0xff]
    %v614 = vld [vmem:[#allocation5 + $0x70] sm:$0xff]
    %v615 = vld [vmem:[#allocation5 + $0x78] sm:$0xff]
    %v616 = vld [vmem:[#allocation5 + $0x80] sm:$0xff]
    %v617 = vld [vmem:[#allocation5 + $0x88] sm:$0xff]
    %v618 = vld [vmem:[#allocation5 + $0x90] sm:$0xff]
    %v619 = vld [vmem:[#allocation5 + $0x98] sm:$0xff]
    %v620 = vld [vmem:[#allocation5 + $0xa0] sm:$0xff]
    %v621 = vld [vmem:[#allocation5 + $0xa8] sm:$0xff]
    %v622 = vld [vmem:[#allocation5 + $0xb0] sm:$0xff]
    %v623 = vld [vmem:[#allocation5 + $0xb8] sm:$0xff]
    %v624 = vld [vmem:[#allocation5 + $0xc0] sm:$0xff]
    %v625 = vld [vmem:[#allocation5 + $0xc8] sm:$0xff]
    %v626 = vld [vmem:[#allocation5 + $0xd0] sm:$0xff]
    %v627 = vld [vmem:[#allocation5 + $0xd8] sm:$0xff]
    %v628 = vld [vmem:[#allocation5 + $0xe0] sm:$0xff]
    %v629 = vld [vmem:[#allocation5 + $0xe8] sm:$0xff]
    %v630 = vld [vmem:[#allocation5 + $0xf0] sm:$0xff]
    %v631 = vld [vmem:[#allocation5 + $0xf8] sm:$0xff]
    %v632 = vld [vmem:[%s5] sm:$0x3]
    %v634 = vperm.slane %v632, 0
    %v635 = vperm.slane %v632, 1
    %v670 = vunpack.c.l.b16 %v600
    %v671 = vunpack.c.h.b16 %v600
    %v672 = vunpack.c.l.b16 %v601
    %v673 = vunpack.c.h.b16 %v601
    %v674 = vunpack.c.l.b16 %v602
    %v675 = vunpack.c.h.b16 %v602
    %v676 = vunpack.c.l.b16 %v603
    %v677 = vunpack.c.h.b16 %v603
    %v678 = vunpack.c.l.b16 %v604
    %v679 = vunpack.c.h.b16 %v604
    %v680 = vunpack.c.l.b16 %v605
    %v681 = vunpack.c.h.b16 %v605
    %v682 = vunpack.c.l.b16 %v606
    %v683 = vunpack.c.h.b16 %v606
    %v684 = vunpack.c.l.b16 %v607
    %v685 = vunpack.c.h.b16 %v607
    %v686 = vunpack.c.l.b16 %v608
    %v687 = vunpack.c.h.b16 %v608
    %v688 = vunpack.c.l.b16 %v609
    %v689 = vunpack.c.h.b16 %v609
    %v690 = vunpack.c.l.b16 %v610
    %v691 = vunpack.c.h.b16 %v610
    %v692 = vunpack.c.l.b16 %v611
    %v693 = vunpack.c.h.b16 %v611
    %v694 = vunpack.c.l.b16 %v612
    %v695 = vunpack.c.h.b16 %v612
    %v696 = vunpack.c.l.b16 %v613
    %v697 = vunpack.c.h.b16 %v613
    %v698 = vunpack.c.l.b16 %v614
    %v699 = vunpack.c.h.b16 %v614
    %v700 = vunpack.c.l.b16 %v615
    %v701 = vunpack.c.h.b16 %v615
    %v702 = vunpack.c.l.b16 %v616
    %v703 = vunpack.c.h.b16 %v616
    %v704 = vunpack.c.l.b16 %v617
    %v705 = vunpack.c.h.b16 %v617
    %v706 = vunpack.c.l.b16 %v618
    %v707 = vunpack.c.h.b16 %v618
    %v708 = vunpack.c.l.b16 %v619
    %v709 = vunpack.c.h.b16 %v619
    %v710 = vunpack.c.l.b16 %v620
    %v711 = vunpack.c.h.b16 %v620
    %v712 = vunpack.c.l.b16 %v621
    %v713 = vunpack.c.h.b16 %v621
    %v714 = vunpack.c.l.b16 %v622
    %v715 = vunpack.c.h.b16 %v622
    %v716 = vunpack.c.l.b16 %v623
    %v717 = vunpack.c.h.b16 %v623
    %v718 = vunpack.c.l.b16 %v624
    %v719 = vunpack.c.h.b16 %v624
    %v720 = vunpack.c.l.b16 %v625
    %v721 = vunpack.c.h.b16 %v625
    %v722 = vunpack.c.l.b16 %v626
    %v723 = vunpack.c.h.b16 %v626
    %v724 = vunpack.c.l.b16 %v627
    %v725 = vunpack.c.h.b16 %v627
    %v726 = vunpack.c.l.b16 %v628
    %v727 = vunpack.c.h.b16 %v628
    %v728 = vunpack.c.l.b16 %v629
    %v729 = vunpack.c.h.b16 %v629
    %v730 = vunpack.c.l.b16 %v630
    %v731 = vunpack.c.h.b16 %v630
    %v732 = vunpack.c.l.b16 %v631
    %v733 = vunpack.c.h.b16 %v631
    %v734 = vpack.c.b16 %v672, %v670
    %v735 = vpack.c.b16 %v673, %v671
    %v736 = vpack.c.b16 %v676, %v674
    %v737 = vpack.c.b16 %v677, %v675
    %v738 = vpack.c.b16 %v680, %v678
    %v739 = vpack.c.b16 %v681, %v679
    %v740 = vpack.c.b16 %v684, %v682
    %v741 = vpack.c.b16 %v685, %v683
    %v742 = vpack.c.b16 %v688, %v686
    %v743 = vpack.c.b16 %v689, %v687
    %v744 = vpack.c.b16 %v692, %v690
    %v745 = vpack.c.b16 %v693, %v691
    %v746 = vpack.c.b16 %v696, %v694
    %v747 = vpack.c.b16 %v697, %v695
    %v748 = vpack.c.b16 %v700, %v698
    %v749 = vpack.c.b16 %v701, %v699
    %v750 = vpack.c.b16 %v704, %v702
    %v751 = vpack.c.b16 %v705, %v703
    %v752 = vpack.c.b16 %v708, %v706
    %v753 = vpack.c.b16 %v709, %v707
    %v754 = vpack.c.b16 %v712, %v710
    %v755 = vpack.c.b16 %v713, %v711
    %v756 = vpack.c.b16 %v716, %v714
    %v757 = vpack.c.b16 %v717, %v715
    %v758 = vpack.c.b16 %v720, %v718
    %v759 = vpack.c.b16 %v721, %v719
    %v760 = vpack.c.b16 %v724, %v722
    %v761 = vpack.c.b16 %v725, %v723
    %v762 = vpack.c.b16 %v728, %v726
    %v763 = vpack.c.b16 %v729, %v727
    %v764 = vpack.c.b16 %v732, %v730
    %v765 = vpack.c.b16 %v733, %v731
    %798 = vmatpush.bf16.msra.mxu0 %v748
    %799 = vmatpush.bf16.msra.mxu0 %v746
    %800 = vmatpush.bf16.msra.mxu0 %v744
    %801 = vmatpush.bf16.msra.mxu0 %v742
    %802 = vmatpush.bf16.msra.mxu0 %v740
    %803 = vmatpush.bf16.msra.mxu0 %v738
    %804 = vmatpush.bf16.msra.mxu0 %v736
    %805 = vmatpush.bf16.msra.mxu0 %v734
    %806 = vmatmul.bf16.gmra.mxu0 %v598
    %v807 = vpop.f32.mrf.mxu0
    %v808 = vadd.f32 %v634, %v807
    %v809 = vpop.f32.mrf.mxu0
    %810 = vdwg.mxu0
    %811 = vmatpush.bf16.msra.mxu0 %v764
    %812 = vmatpush.bf16.msra.mxu0 %v762
    %813 = vmatpush.bf16.msra.mxu0 %v760
    %814 = vmatpush.bf16.msra.mxu0 %v758
    %815 = vmatpush.bf16.msra.mxu0 %v756
    %816 = vmatpush.bf16.msra.mxu0 %v754
    %817 = vmatpush.bf16.msra.mxu0 %v752
    %818 = vmatpush.bf16.msra.mxu0 %v750
    %819 = vmatmul.bf16.gmra.mxu0 %v599
    %v820 = vpop.f32.mrf.mxu0
    %v821 = vadd.f32 %v808, %v820
    %v822 = vpop.f32.mrf.mxu0
    %823 = vdwg.mxu0
    %824 = vmatpush.bf16.msra.mxu0 %v749
    %825 = vmatpush.bf16.msra.mxu0 %v747
    %826 = vmatpush.bf16.msra.mxu0 %v745
    %827 = vmatpush.bf16.msra.mxu0 %v743
    %828 = vmatpush.bf16.msra.mxu0 %v741
    %829 = vmatpush.bf16.msra.mxu0 %v739
    %830 = vmatpush.bf16.msra.mxu0 %v737
    %831 = vmatpush.bf16.msra.mxu0 %v735
    %832 = vmatmul.bf16.gmra.mxu0 %v598
    %v833 = vpop.f32.mrf.mxu0
    %v834 = vadd.f32 %v635, %v833
    %v835 = vpop.f32.mrf.mxu0
    %836 = vdwg.mxu0
    %837 = vmatpush.bf16.msra.mxu0 %v765
    %838 = vmatpush.bf16.msra.mxu0 %v763
    %839 = vmatpush.bf16.msra.mxu0 %v761
    %840 = vmatpush.bf16.msra.mxu0 %v759
    %841 = vmatpush.bf16.msra.mxu0 %v757
    %842 = vmatpush.bf16.msra.mxu0 %v755
    %843 = vmatpush.bf16.msra.mxu0 %v753
    %844 = vmatpush.bf16.msra.mxu0 %v751
    %845 = vmatmul.bf16.gmra.mxu0 %v599
    %v846 = vpop.f32.mrf.mxu0
    %v847 = vadd.f32 %v834, %v846
    %v848 = vpop.f32.mrf.mxu0
    %849 = vdwg.mxu0
    %850 = vst [vmem:[#allocation7] sm:$0xff] %v821
    %851 = vst [vmem:[#allocation7 + $0x8] sm:$0xff] %v847
    // Predicated region
    $region34: #{tpu_custom_call.1} parent=1 // pred_check
      _
    $region35: #{tpu_custom_call.1} parent=1 // pred_check_branch
      %853 = sbr.rel (0) target = $region37
    $region36: #{tpu_custom_call.1} parent=1 // pred_region
      %855 = vsyncadd [#allocation4], 0
      %s857 = sshll.u32 [#allocation7], 4
      %s858 = int_to_ptr.vmem [resolvable:$true] %s857
      %s859 = sshll.u32 %s6, 4
      %s860 = int_to_ptr.hbm [resolvable:$true] %s859
      %862 = dma.vmem_to_hbm [thread:$0]  %s858, 256, %s860, [#allocation4]
    $region37: #{tpu_custom_call.1} parent=1 // pred_fallthru
      _
    // Predicated region
    $region38: #{tpu_custom_call.1} parent=1 // pred_check
      _
    $region39: #{tpu_custom_call.1} parent=1 // pred_check_branch
      %864 = sbr.rel (0) target = $region41
    $region40: #{tpu_custom_call.1} parent=1 // pred_region
      %866 = dma.done [#allocation4], 256
    $region41: #{tpu_custom_call.1} parent=1 // pred_fallthru
      _
    %867 = vsyncpa [#allocation3], 1
    %868 = vsyncpa [#allocation6], 1
    %869 = vsyncpa [#allocation4], 1

</llo_original>
